<compile_context>
chip_gen: v6e
topology: v6e:2x2x1
jax: 0.10.0
libtpu: 0.0.40
codegen_flags: <defaults>
</compile_context>

<pallas_src>
import jax
import jax.numpy as jnp
from jax.experimental import pallas as pl
from jax.experimental.pallas import tpu as pltpu


# ----------------------------------------------------------------------------
# Kernel
# ----------------------------------------------------------------------------
def _make_ca_kernel(HW, T, K, may_mask, fuse_mlp, x_dtype):
    """Builds the CA kernel body.

    HW:       total flattened spatial size (H*W).
    T:        spatial tile (lane) size of one x block.
    K:        number of grid steps along the reduction axis per (batch, split).
    may_mask: True if any tile can contain out-of-range (ragged/phantom) lanes.
    fuse_mlp: True  -> kernel also runs the 1x1-conv MLP + sigmoid (S == 1 path).
              False -> kernel emits per-(batch, split) partial (sum, max).
    """
    inv_hw = 1.0 / float(HW)
    if jnp.issubdtype(x_dtype, jnp.floating):
        neg_fill = jnp.finfo(x_dtype).min   # safe for bf16/fp16/fp8 too
    else:
        neg_fill = jnp.iinfo(x_dtype).min

    def _accumulate(x, sum_ref, max_ref, masked, g):
        # x: (C, T) in native dtype; accumulators are (C, 1) f32, C on sublanes.
        if masked:
            lane = jax.lax.broadcasted_iota(jnp.int32, (1, T), 1)
            valid = (g * T + lane) < HW                       # (1, T) -> bcast over C
            xs = jnp.where(valid, x, jnp.zeros_like(x))
            xm = jnp.where(valid, x, jnp.full_like(x, neg_fill))
        else:
            xs = x
            xm = x
        # keepdims keeps C on sublanes: no per-step sublane->lane relayout.
        sum_ref[...] += jnp.sum(xs, axis=1, keepdims=True, dtype=jnp.float32)
        max_ref[...] = jnp.maximum(
            max_ref[...], jnp.max(xm, axis=1, keepdims=True).astype(jnp.float32))

    def _body(x_ref, sum_ref, max_ref):
        k = pl.program_id(2)

        @pl.when(k == 0)
        def _init():
            sum_ref[...] = jnp.zeros_like(sum_ref)
            max_ref[...] = jnp.full_like(max_ref, -jnp.inf)

        x = x_ref[0]                                # (C, T), native dtype
        g = pl.program_id(1) * K + k                # global (unclamped) block index

        if may_mask:
            # Masking only ever applies to the global tail / phantom tiles; keep
            # the hot path free of iota/compare/select.
            is_tail = (g * T + T) > HW

            @pl.when(jnp.logical_not(is_tail))
            def _hot():
                _accumulate(x, sum_ref, max_ref, masked=False, g=g)

            @pl.when(is_tail)
            def _tail():
                _accumulate(x, sum_ref, max_ref, masked=True, g=g)
        else:
            _accumulate(x, sum_ref, max_ref, masked=False, g=g)
        return k

    if fuse_mlp:
        def kernel(x_ref, w1_ref, w2_ref, out_ref, sum_ref, max_ref):
            # x_ref: (1, C, T)   w1_ref: (Cr, C)   w2_ref: (C, Cr)
            # out_ref: (1, C, 1) sum_ref/max_ref: (C, 1) f32
            k = _body(x_ref, sum_ref, max_ref)

            @pl.when(k == K - 1)
            def _finalize():
                avg = sum_ref[...] * inv_hw                      # (C, 1)
                mx = max_ref[...]                                # (C, 1)
                pooled = jnp.concatenate([avg, mx], axis=1)      # (C, 2): one MLP pass
                w1 = w1_ref[...].astype(jnp.float32)             # (Cr, C) -- used as-is
                w2 = w2_ref[...].astype(jnp.float32)             # (C, Cr) -- used as-is
                h = jnp.maximum(
                    jnp.dot(w1, pooled, preferred_element_type=jnp.float32), 0.0)
                o = jnp.dot(w2, h, preferred_element_type=jnp.float32)   # (C, 2)
                attn = jax.nn.sigmoid(o[:, 0:1] + o[:, 1:2])             # (C, 1)
                out_ref[...] = attn[None].astype(out_ref.dtype)          # (1, C, 1)
        return kernel

    def kernel(x_ref, out_ref, sum_ref, max_ref):
        # out_ref: (1, 1, C, 2) f32 partial [sum, max] for this (batch, split).
        k = _body(x_ref, sum_ref, max_ref)

        @pl.when(k == K - 1)
        def _finalize():
            out_ref[...] = jnp.concatenate(
                [sum_ref[...], max_ref[...]], axis=1)[None, None]
    return kernel


# ----------------------------------------------------------------------------
# Generation-aware sizing
# ----------------------------------------------------------------------------
def _chip_budget():
    """(x_block_target_bytes, vmem_limit_bytes, x_buffer_count) per TPU generation."""
    cap = None
    try:
        info = pltpu.get_tpu_info()
        cap = getattr(info, "vmem_capacity_bytes", None)
    except Exception:
        cap = None
    if not cap:
        # Unknown generation: conservative, safe on v5e/v6e/v7x alike.
        return 8 << 20, 40 << 20, 2
    if cap >= (96 << 20):
        # v5e / v6e: 128 MiB VMEM, slower HBM -> large streaming blocks.
        return 16 << 20, 64 << 20, 2
    # v7x: 64 MiB VMEM, 3.2 TB/s HBM -> smaller blocks but a deeper pipeline.
    return 10 << 20, 44 << 20, 3


def _choose_t_hw(C, HW, itemsize, target_bytes):
    t = max(target_bytes // max(C * itemsize, 1), 128)
    t = (t // 128) * 128
    if t >= HW:
        return HW          # single full-extent spatial block (no masking needed)
    return t


# ----------------------------------------------------------------------------
# Wrapper (full CA forward)
# ----------------------------------------------------------------------------
def ca_forward(x, w1, w2, *, t_hw=None, spatial_splits=None):
    """x: (B, C, H, W); w1: (C//16, C) fc1 1x1-conv weight; w2: (C, C//16) fc2.

    Returns the channel-attention map, shape (B, C, 1, 1), float32."""
    B, C, H, W = x.shape
    Cr = w1.shape[0]
    assert w1.shape == (Cr, C) and w2.shape == (C, Cr)
    HW = H * W
    x_flat = x.reshape(B, C, HW)

    target_block, vmem_limit, x_buffers = _chip_budget()
    if t_hw is None:
        t_hw = _choose_t_hw(C, HW, x.dtype.itemsize, target_block)
    t_hw = min(int(t_hw), HW)
    if t_hw < HW:
        assert t_hw % 128 == 0, "spatial tile must be lane-aligned (multiple of 128)"
    nb = pl.cdiv(HW, t_hw)                      # number of real spatial blocks

    if spatial_splits is None:
        # v7x has 2 TensorCores; with B == 1 the batch axis alone cannot feed both,
        # so split the spatial stream into 2 "parallel" halves. For B >= 2 the
        # batch axis already provides the parallelism.
        spatial_splits = 2 if B == 1 else 1
    S = max(1, min(int(spatial_splits), nb))
    K = pl.cdiv(nb, S)                          # reduction steps per (batch, split)
    fuse_mlp = (S == 1)
    may_mask = (HW % t_hw != 0) or (S * K > nb)

    if S * K > nb:
        # Phantom steps (uneven split): clamp to the last real block and mask it.
        def x_map(b, s, k):
            return (b, 0, jnp.minimum(s * K + k, nb - 1))
    else:
        def x_map(b, s, k):
            return (b, 0, s * K + k)

    x_spec_kwargs = {}
    if x_buffers > 2 and K >= x_buffers:
        x_spec_kwargs["pipeline_mode"] = pl.Buffered(x_buffers)
    x_spec = pl.BlockSpec((1, C, t_hw), x_map, **x_spec_kwargs)

    kernel = _make_ca_kernel(HW, t_hw, K, may_mask, fuse_mlp, x_flat.dtype)

    flops = 2 * B * C * HW + 8 * B * C * Cr
    bytes_accessed = (x_flat.size * x_flat.dtype.itemsize
                      + w1.size * w1.dtype.itemsize
                      + w2.size * w2.dtype.itemsize
                      + B * C * 4)
    cost = pl.CostEstimate(flops=flops, transcendentals=B * C,
                           bytes_accessed=bytes_accessed)
    cparams = pltpu.CompilerParams(
        dimension_semantics=("parallel", "parallel", "arbitrary"),
        vmem_limit_bytes=vmem_limit)
    scratch = [pltpu.VMEM((C, 1), jnp.float32),   # running sum (C on sublanes)
               pltpu.VMEM((C, 1), jnp.float32)]   # running max

    if fuse_mlp:
        out = pl.pallas_call(
            kernel,
            out_shape=jax.ShapeDtypeStruct((B, C, 1), jnp.float32),
            grid_spec=pltpu.PrefetchScalarGridSpec(
                num_scalar_prefetch=0,
                grid=(B, S, K),
                in_specs=[
                    x_spec,
                    pl.BlockSpec((Cr, C), lambda b, s, k: (0, 0)),   # resident weights
                    pl.BlockSpec((C, Cr), lambda b, s, k: (0, 0)),
                ],
                out_specs=pl.BlockSpec((1, C, 1), lambda b, s, k: (b, 0, 0)),
                scratch_shapes=scratch),
            compiler_params=cparams,
            cost_estimate=cost,
        )(x_flat, w1, w2)
        return out.reshape(B, C, 1, 1)

    # Split (B == 1 / dual-TensorCore) path: kernel emits per-(batch, split)
    # partial [sum, max]; the tiny O(B*C) MLP + sigmoid epilogue runs as plain XLA.
    part = pl.pallas_call(
        kernel,
        out_shape=jax.ShapeDtypeStruct((B, S, C, 2), jnp.float32),
        grid_spec=pltpu.PrefetchScalarGridSpec(
            num_scalar_prefetch=0,
            grid=(B, S, K),
            in_specs=[x_spec],
            out_specs=pl.BlockSpec((1, 1, C, 2), lambda b, s, k: (b, s, 0, 0)),
            scratch_shapes=scratch),
        compiler_params=cparams,
        cost_estimate=cost,
    )(x_flat)

    total_sum = part[..., 0].sum(axis=1)                 # (B, C)
    total_max = part[..., 1].max(axis=1)                 # (B, C)
    avg = total_sum * (1.0 / HW)
    w1f = w1.astype(jnp.float32)
    w2f = w2.astype(jnp.float32)

    def mlp(v):
        return jnp.maximum(v @ w1f.T, 0.0) @ w2f.T

    attn = jax.nn.sigmoid(mlp(avg) + mlp(total_max))     # (B, C)
    return attn.reshape(B, C, 1, 1)


# ----------------------------------------------------------------------------
# Pure-JAX reference mirroring the PyTorch forward
# ----------------------------------------------------------------------------
def ca_reference(x, w1, w2):
    avg = jnp.mean(x, axis=(2, 3))                       # (B, C)
    mx = jnp.max(x, axis=(2, 3))                         # (B, C)

    def mlp(v):
        return jnp.maximum(v @ w1.T, 0.0) @ w2.T

    return jax.nn.sigmoid(mlp(avg) + mlp(mx))[:, :, None, None]


if __name__ == "__main__":
    key = jax.random.PRNGKey(0)
    kx, k1, k2, kx2, kx3 = jax.random.split(key, 5)

    B, C = 2, 32                       # in_planes = 32 -> hidden = 32 // 16 = 2
    Cr = C // 16

    w1 = jax.random.normal(k1, (Cr, C), dtype=jnp.float32) * (2.0 / C) ** 0.5
    w2 = jax.random.normal(k2, (C, Cr), dtype=jnp.float32) * (2.0 / Cr) ** 0.5

    # 1) Fused path, auto tile size (single full-extent spatial block), B = 2.
    x = jax.random.normal(kx, (B, C, 16, 16), dtype=jnp.float32)
    out = ca_forward(x, w1, w2)
    jax.block_until_ready(out)
    assert out.shape == (B, C, 1, 1)
    assert jnp.allclose(out, ca_reference(x, w1, w2), atol=1e-5, rtol=1e-5)

    # 2) Fused path, forced multi-tile streaming with a ragged last tile
    #    (H*W = 225, tile = 128): exercises the tail-only masking branch.
    x2 = jax.random.normal(kx2, (B, C, 15, 15), dtype=jnp.float32)
    out2 = ca_forward(x2, w1, w2, t_hw=128)
    jax.block_until_ready(out2)
    assert jnp.allclose(out2, ca_reference(x2, w1, w2), atol=1e-5, rtol=1e-5)

    # 3) B = 1: dual-TensorCore spatial split (partial-pooling kernel + XLA
    #    epilogue), including a ragged tail and a fully-masked phantom block
    #    (H*W = 361, tile = 128 -> 3 real blocks split over 2 halves).
    x3 = jax.random.normal(kx3, (1, C, 19, 19), dtype=jnp.float32)
    out3 = ca_forward(x3, w1, w2, t_hw=128)
    jax.block_until_ready(out3)
    assert jnp.allclose(out3, ca_reference(x3, w1, w2), atol=1e-5, rtol=1e-5)

    print("KERNEL_OK")
</pallas_src>

<mosaic_0001>
module attributes {stable_mosaic.version = 11 : i64} {
  func.func @kernel(%arg0: i32, %arg1: i32, %arg2: i32, %arg3: memref<1x32x256xf32, #tpu.memory_space<vmem>>, %arg4: memref<2x32xf32, #tpu.memory_space<vmem>>, %arg5: memref<32x2xf32, #tpu.memory_space<vmem>>, %arg6: memref<1x32x1xf32, #tpu.memory_space<vmem>>, %arg7: memref<32x1xf32, #tpu.memory_space<vmem>>, %arg8: memref<32x1xf32, #tpu.memory_space<vmem>>) attributes {dimension_semantics = [#tpu.dimension_semantics<parallel>, #tpu.dimension_semantics<parallel>, #tpu.dimension_semantics<arbitrary>], iteration_bounds = array<i64: 2, 1, 1>, scalar_prefetch = 0 : i64, scratch_operands = 2 : i64, tpu.core_type = #tpu.core_type<tc>, window_params = [{transform_indices = @transform_0, window_bounds = array<i64: 1, 32, 256>}, {pipeline_mode = #tpu.pipeline_mode<synchronous>, transform_indices = @transform_1, window_bounds = array<i64: 2, 32>}, {pipeline_mode = #tpu.pipeline_mode<synchronous>, transform_indices = @transform_2, window_bounds = array<i64: 32, 2>}, {transform_indices = @transform_3, window_bounds = array<i64: 1, 32, 1>}]} {
    %c0_i32 = arith.constant 0 : i32
    %0 = arith.cmpi eq, %arg2, %c0_i32 : i32
    %1 = arith.extui %0 : i1 to i32
    %c0_i32_0 = arith.constant 0 : i32
    %2 = arith.cmpi ne, %1, %c0_i32_0 : i32
    scf.if %2 {
      %cst_14 = arith.constant 0.000000e+00 : f32
      %18 = vector.broadcast %cst_14 : f32 to vector<32x1xf32>
      %c0_15 = arith.constant 0 : index
      %c0_16 = arith.constant 0 : index
      %19 = vector.load %arg7[%c0_15, %c0_16] : memref<32x1xf32, #tpu.memory_space<vmem>>, vector<32x1xf32>
      tpu.vector_store %arg7[%c0_15, %c0_16], %18 {strides = array<i32>} : memref<32x1xf32, #tpu.memory_space<vmem>>, vector<32x1xf32>,
      %cst_17 = arith.constant 0xFF800000 : f32
      %20 = vector.broadcast %cst_17 : f32 to vector<32x1xf32>
      %c0_18 = arith.constant 0 : index
      %c0_19 = arith.constant 0 : index
      %21 = vector.load %arg8[%c0_18, %c0_19] : memref<32x1xf32, #tpu.memory_space<vmem>>, vector<32x1xf32>
      tpu.vector_store %arg8[%c0_18, %c0_19], %20 {strides = array<i32>} : memref<32x1xf32, #tpu.memory_space<vmem>>, vector<32x1xf32>,
    } else {
    }
    %c0 = arith.constant 0 : index
    %c0_1 = arith.constant 0 : index
    %c0_2 = arith.constant 0 : index
    %3 = vector.load %arg3[%c0, %c0_1, %c0_2] : memref<1x32x256xf32, #tpu.memory_space<vmem>>, vector<1x32x256xf32>
    %4 = vector.shape_cast %3 : vector<1x32x256xf32> to vector<32x256xf32>
    %c0_3 = arith.constant 0 : index
    %c0_4 = arith.constant 0 : index
    %5 = vector.load %arg7[%c0_3, %c0_4] : memref<32x1xf32, #tpu.memory_space<vmem>>, vector<32x1xf32>
    %cst = arith.constant dense<0.000000e+00> : vector<32xf32>
    %6 = vector.multi_reduction <add>, %4, %cst [1] : vector<32x256xf32> to vector<32xf32>
    %7 = vector.shape_cast %6 : vector<32xf32> to vector<32x1xf32>
    %8 = arith.addf %5, %7 : vector<32x1xf32>
    %c0_5 = arith.constant 0 : index
    %c0_6 = arith.constant 0 : index
    %9 = vector.load %arg7[%c0_5, %c0_6] : memref<32x1xf32, #tpu.memory_space<vmem>>, vector<32x1xf32>
    tpu.vector_store %arg7[%c0_5, %c0_6], %8 {strides = array<i32>} : memref<32x1xf32, #tpu.memory_space<vmem>>, vector<32x1xf32>,
    %c0_7 = arith.constant 0 : index
    %c0_8 = arith.constant 0 : index
    %10 = vector.load %arg8[%c0_7, %c0_8] : memref<32x1xf32, #tpu.memory_space<vmem>>, vector<32x1xf32>
    %cst_9 = arith.constant dense<0xFF800000> : vector<32xf32>
    %11 = vector.multi_reduction <maximumf>, %4, %cst_9 [1] : vector<32x256xf32> to vector<32xf32>
    %12 = vector.shape_cast %11 : vector<32xf32> to vector<32x1xf32>
    %13 = arith.maximumf %10, %12 : vector<32x1xf32>
    %c0_10 = arith.constant 0 : index
    %c0_11 = arith.constant 0 : index
    %14 = vector.load %arg8[%c0_10, %c0_11] : memref<32x1xf32, #tpu.memory_space<vmem>>, vector<32x1xf32>
    tpu.vector_store %arg8[%c0_10, %c0_11], %13 {strides = array<i32>} : memref<32x1xf32, #tpu.memory_space<vmem>>, vector<32x1xf32>,
    %c0_i32_12 = arith.constant 0 : i32
    %15 = arith.cmpi eq, %arg2, %c0_i32_12 : i32
    %16 = arith.extui %15 : i1 to i32
    %c0_i32_13 = arith.constant 0 : i32
    %17 = arith.cmpi ne, %16, %c0_i32_13 : i32
    scf.if %17 {
      %c0_14 = arith.constant 0 : index
      %c0_15 = arith.constant 0 : index
      %18 = vector.load %arg7[%c0_14, %c0_15] : memref<32x1xf32, #tpu.memory_space<vmem>>, vector<32x1xf32>
      %cst_16 = arith.constant 3.906250e-03 : f32
      %19 = vector.broadcast %cst_16 : f32 to vector<32x1xf32>
      %20 = arith.mulf %18, %19 : vector<32x1xf32>
      %c0_17 = arith.constant 0 : index
      %c0_18 = arith.constant 0 : index
      %21 = vector.load %arg8[%c0_17, %c0_18] : memref<32x1xf32, #tpu.memory_space<vmem>>, vector<32x1xf32>
      %22 = tpu.concatenate %20, %21 in 1 : vector<32x1xf32>, vector<32x1xf32> -> vector<32x2xf32>
      %c0_19 = arith.constant 0 : index
      %c0_20 = arith.constant 0 : index
      %23 = vector.load %arg4[%c0_19, %c0_20] : memref<2x32xf32, #tpu.memory_space<vmem>>, vector<2x32xf32>
      %c0_21 = arith.constant 0 : index
      %c0_22 = arith.constant 0 : index
      %24 = vector.load %arg5[%c0_21, %c0_22] : memref<32x2xf32, #tpu.memory_space<vmem>>, vector<32x2xf32>
      %cst_23 = arith.constant dense<0.000000e+00> : vector<2x2xf32>
      %25 = tpu.matmul %23, %22, %cst_23 {dimension_numbers = #tpu.dot_dimension_numbers<[1], [0], [0], [1], [0, 0, 1, 1], [], []>} : vector<2x32xf32>, vector<32x2xf32>, vector<2x2xf32> -> vector<2x2xf32>
      %cst_24 = arith.constant 0.000000e+00 : f32
      %26 = vector.broadcast %cst_24 : f32 to vector<2x2xf32>
      %27 = arith.maximumf %25, %26 : vector<2x2xf32>
      %cst_25 = arith.constant dense<0.000000e+00> : vector<32x2xf32>
      %28 = tpu.matmul %24, %27, %cst_25 {dimension_numbers = #tpu.dot_dimension_numbers<[1], [0], [0], [1], [0, 0, 1, 1], [], []>} : vector<32x2xf32>, vector<2x2xf32>, vector<32x2xf32> -> vector<32x2xf32>
      %29 = vector.extract_strided_slice %28 {offsets = [0, 0], sizes = [32, 1], strides = [1, 1]} : vector<32x2xf32> to vector<32x1xf32>
      %30 = vector.extract_strided_slice %28 {offsets = [0, 1], sizes = [32, 1], strides = [1, 1]} : vector<32x2xf32> to vector<32x1xf32>
      %31 = arith.addf %29, %30 : vector<32x1xf32>
      %32 = arith.negf %31 : vector<32x1xf32>
      %33 = math.exp %32 : vector<32x1xf32>
      %cst_26 = arith.constant 1.000000e+00 : f32
      %34 = vector.broadcast %cst_26 : f32 to vector<32x1xf32>
      %35 = arith.addf %34, %33 : vector<32x1xf32>
      %36 = arith.divf %34, %35 : vector<32x1xf32>
      %37 = vector.shape_cast %36 : vector<32x1xf32> to vector<1x32x1xf32>
      %c0_27 = arith.constant 0 : index
      %c0_28 = arith.constant 0 : index
      %c0_29 = arith.constant 0 : index
      %38 = vector.load %arg6[%c0_27, %c0_28, %c0_29] : memref<1x32x1xf32, #tpu.memory_space<vmem>>, vector<1x32x1xf32>
      tpu.vector_store %arg6[%c0_27, %c0_28, %c0_29], %37 {strides = array<i32>} : memref<1x32x1xf32, #tpu.memory_space<vmem>>, vector<1x32x1xf32>,
    } else {
    }
    return
  }
  func.func @transform_0(%arg0: i32, %arg1: i32, %arg2: i32) -> (i32, i32, i32) {
    %c1_i32 = arith.constant 1 : i32
    %0 = arith.muli %arg1, %c1_i32 : i32
    %1 = arith.addi %0, %arg2 : i32
    %c0_i32 = arith.constant 0 : i32
    %c0_i32_0 = arith.constant 0 : i32
    return %arg0, %c0_i32, %1 : i32, i32, i32
  }
  func.func @transform_1(%arg0: i32, %arg1: i32, %arg2: i32) -> (i32, i32) {
    %c0_i32 = arith.constant 0 : i32
    %c0_i32_0 = arith.constant 0 : i32
    %c0_i32_1 = arith.constant 0 : i32
    return %c0_i32, %c0_i32_0 : i32, i32
  }
  func.func @transform_2(%arg0: i32, %arg1: i32, %arg2: i32) -> (i32, i32) {
    %c0_i32 = arith.constant 0 : i32
    %c0_i32_0 = arith.constant 0 : i32
    %c0_i32_1 = arith.constant 0 : i32
    return %c0_i32, %c0_i32_0 : i32, i32
  }
  func.func @transform_3(%arg0: i32, %arg1: i32, %arg2: i32) -> (i32, i32, i32) {
    %c0_i32 = arith.constant 0 : i32
    %c0_i32_0 = arith.constant 0 : i32
    %c0_i32_1 = arith.constant 0 : i32
    return %arg0, %c0_i32, %c0_i32_0 : i32, i32, i32
  }
}

</mosaic_0001>

<llo_original>
// kernel: tpu_custom_call.1
$region0: #{tpu_custom_call.1}
  #allocation0 [shape = 'u32[]', space=smem, size = 0x4, offset = 0x4, fixed_abs, tag = 'smem constant byte address 0x4 - core index']
  #allocation1 [shape = 'u32[144,128]{1,0:T(1,128)}', space=vmem, size = 0x12000, scoped, tag = 'internal scratch']
  #allocation2 [shape = 'f32[32,1]{1,0:T(8,128)}', space=vmem, size = 0x4000, scoped, tag = 'scratch operand']
  #allocation3 [shape = 'f32[32,1]{1,0:T(8,128)}', space=vmem, size = 0x4000, scoped, tag = 'scratch operand']
  %s0 = inlined_call_operand.hbm [shape: f32[2,32,256], index: 0, kind: input, shape index: {}]
  %s1 = inlined_call_operand.vmem [shape: f32[2,32], index: 1, kind: input, shape index: {}]
  %s2 = inlined_call_operand.vmem [shape: f32[32,2], index: 2, kind: input, shape index: {}]
  %s3 = inlined_call_operand.vmem [shape: f32[2,32,1], index: 3, kind: output, shape index: {}]
  %s4 = sld [smem:[#allocation0]]
  $region57: #{tpu_custom_call.1} parent=0
    _
  %s6 = ssub.s32 1, %s4
  %s7 = scalar_select 0, %s6, %s4
  $region1: #{tpu_custom_call.1} parent=0
    #allocation4 [shape = 'u8[65536]{0}', space=vmem, size = 0x10000, scoped, tag = 'input window, operand 0']
    #allocation5 [shape = 's32[2]{0}', space=sflag, size = 0x8, scoped, tag = 'scoped memory for tpu_custom_call.1']
    %8 = vsyncpa [#allocation5], 0
    %s9 = scalar_lea.sflag [#allocation5], 1
    %10 = vsyncpa %s9, 0
    loop: start=0, step=1, limit=4
    $region2: #{tpu_custom_call.1} parent=1 // loop_pre_header
      _
    $region3: #{tpu_custom_call.1} parent=1 // loop_header
      %s12 = sphi 0, %s16
      %p13 = scmp.ge.s32.totalorder %s12, 4
      %s19 = sphi 0, %s38
      %s20 = sphi 0, %s34
      %s21 = sphi 0, %s30
      %s22 = sphi 0, %s19
      %s23 = sphi 0, %s20
      %s24 = sphi 0, %s21
      %s25 = sphi 0, %s22
      %s26 = sphi 0, %s23
      %s27 = sphi 0, %s24
      %s45 = sphi 0, %s47
      %s48 = sphi 0, %s45
      %s49 = sphi 0, %s48
      %s65 = sphi 0, %s49
      %s69 = sphi 0, %s69
      %s71 = sphi 0, %s69
      %s72 = sphi 0, %s71
      %s86 = sphi 0, %s72
      %s90 = sphi 0, %s90
      %s92 = sphi 0, %s90
      %s93 = sphi 0, %s92
      %s107 = sphi 0, %s93
      %s113 = sphi 0, %s115
      %s116 = sphi 0, %s113
      %s117 = sphi 0, %s116
      %s133 = sphi 0, %s117
    $region4: #{tpu_custom_call.1} parent=1 // loop_header_branch
      %15 = sbr.rel (%p13) target = $region8
    $region5: #{tpu_custom_call.1} parent=1 // loop_body
      %s17 = ssub.s32 %s12, 1
      %s18 = ssub.s32 %s12, 2
      %s28 = sadd.s32 1, %s21
      %p29 = scmp.ge.s32.totalorder %s28, 1
      %s30 = scalar_select %p29, 0, %s28
      %s31 = sadd.s32 1, %s20
      %s32 = scalar_select %p29, %s31, %s20
      %p33 = scmp.ge.s32.totalorder %s32, 1
      %s34 = scalar_select %p33, 0, %s32
      %s35 = sadd.s32 1, %s19
      %s36 = scalar_select %p33, %s35, %s19
      %p37 = scmp.ge.s32.totalorder %s36, 2
      %s38 = scalar_select %p37, 0, %s36
      %s39 = sadd.s32 %s20, %s21
      %s40 = sadd.s32 %s34, %s30
      %s41 = ssub.s32 %s19, %s38
      %s42 = ssub.s32 %s39, %s40
      %s43 = sor.u32 %s41, %s42
      %p44 = scmp.eq.s32.totalorder %s43, 0
      %s46 = sadd.s32 %s45, 1
      %s47 = scalar_select %p44, %s45, %s46
      %p50 = pneg %p44
      %p51 = scmp.eq.s32.totalorder %s12, 1
      %p52 = por %p50, %p51
      %p53 = scmp.ne.s32.totalorder %s45, %s48
      %p54 = scmp.eq.s32.totalorder %s12, 0
      %p55 = por %p53, %p54
      %p56 = scmp.ne.s32.totalorder %s45, %s48
      %p57 = scmp.eq.s32.totalorder %s17, 1
      %p58 = por %p56, %p57
      %p59 = scmp.ne.s32.totalorder %s48, %s49
      %p60 = scmp.eq.s32.totalorder %s17, 0
      %p61 = por %p59, %p60
      %p62 = scmp.ne.s32.totalorder %s48, %s49
      %p63 = scmp.eq.s32.totalorder %s18, 1
      %p64 = por %p62, %p63
      %p66 = scmp.ne.s32.totalorder %s49, %s65
      %p67 = scmp.eq.s32.totalorder %s18, 0
      %p68 = por %p66, %p67
      %s70 = sadd.s32 %s69, 1
      %p73 = scmp.eq.s32.totalorder %s12, 1
      %p74 = scmp.ne.s32.totalorder %s69, %s71
      %p75 = scmp.eq.s32.totalorder %s12, 0
      %p76 = por %p74, %p75
      %p77 = scmp.ne.s32.totalorder %s69, %s71
      %p78 = scmp.eq.s32.totalorder %s17, 1
      %p79 = por %p77, %p78
      %p80 = scmp.ne.s32.totalorder %s71, %s72
      %p81 = scmp.eq.s32.totalorder %s17, 0
      %p82 = por %p80, %p81
      %p83 = scmp.ne.s32.totalorder %s71, %s72
      %p84 = scmp.eq.s32.totalorder %s18, 1
      %p85 = por %p83, %p84
      %p87 = scmp.ne.s32.totalorder %s72, %s86
      %p88 = scmp.eq.s32.totalorder %s18, 0
      %p89 = por %p87, %p88
      %s91 = sadd.s32 %s90, 1
      %p94 = scmp.eq.s32.totalorder %s12, 1
      %p95 = scmp.ne.s32.totalorder %s90, %s92
      %p96 = scmp.eq.s32.totalorder %s12, 0
      %p97 = por %p95, %p96
      %p98 = scmp.ne.s32.totalorder %s90, %s92
      %p99 = scmp.eq.s32.totalorder %s17, 1
      %p100 = por %p98, %p99
      %p101 = scmp.ne.s32.totalorder %s92, %s93
      %p102 = scmp.eq.s32.totalorder %s17, 0
      %p103 = por %p101, %p102
      %p104 = scmp.ne.s32.totalorder %s92, %s93
      %p105 = scmp.eq.s32.totalorder %s18, 1
      %p106 = por %p104, %p105
      %p108 = scmp.ne.s32.totalorder %s93, %s107
      %p109 = scmp.eq.s32.totalorder %s18, 0
      %p110 = por %p108, %p109
      %s111 = ssub.s32 %s19, %s38
      %p112 = scmp.eq.s32.totalorder %s111, 0
      %s114 = sadd.s32 %s113, 1
      %s115 = scalar_select %p112, %s113, %s114
      %p118 = pneg %p112
      %p119 = scmp.eq.s32.totalorder %s12, 1
      %p120 = por %p118, %p119
      %p121 = scmp.ne.s32.totalorder %s113, %s116
      %p122 = scmp.eq.s32.totalorder %s12, 0
      %p123 = por %p121, %p122
      %p124 = scmp.ne.s32.totalorder %s113, %s116
      %p125 = scmp.eq.s32.totalorder %s17, 1
      %p126 = por %p124, %p125
      %p127 = scmp.ne.s32.totalorder %s116, %s117
      %p128 = scmp.eq.s32.totalorder %s17, 0
      %p129 = por %p127, %p128
      %p130 = scmp.ne.s32.totalorder %s116, %s117
      %p131 = scmp.eq.s32.totalorder %s18, 1
      %p132 = por %p130, %p131
      %p134 = scmp.ne.s32.totalorder %s117, %s133
      %p135 = scmp.eq.s32.totalorder %s18, 0
      %p136 = por %p134, %p135
      %p137 = scmp.le.s32.totalorder 1, %s12
      %p138 = scmp.lt.s32.totalorder %s12, 3
      %p139 = pnand %p137, %p138
      %p140 = pneg %p139
      // Predicated region
      $region9: #{tpu_custom_call.1} parent=5 // pred_check
        _
      $region10: #{tpu_custom_call.1} parent=5 // pred_check_branch
        %142 = sbr.rel (%p139) target = $region12
      $region11: #{tpu_custom_call.1} parent=5 // pred_region
        %s143 = ssub.s32 %s12, 1
        // Predicated region
        $region13: #{tpu_custom_call.1} parent=11 // pred_check
          %p144 = pneg %p82
        $region14: #{tpu_custom_call.1} parent=11 // pred_check_branch
          %146 = sbr.rel (%p144) target = $region16
        $region15: #{tpu_custom_call.1} parent=11 // pred_region
          _
        $region16: #{tpu_custom_call.1} parent=11 // pred_fallthru
          _
        // Predicated region
        $region17: #{tpu_custom_call.1} parent=11 // pred_check
          %p147 = pneg %p103
        $region18: #{tpu_custom_call.1} parent=11 // pred_check_branch
          %149 = sbr.rel (%p147) target = $region20
        $region19: #{tpu_custom_call.1} parent=11 // pred_region
          _
        $region20: #{tpu_custom_call.1} parent=11 // pred_fallthru
          _
      $region12: #{tpu_custom_call.1} parent=5 // pred_fallthru
        _
      %p150 = scmp.lt.s32.totalorder %s12, 2
      // Predicated region
      $region21: #{tpu_custom_call.1} parent=5 // pred_check
        %p151 = pneg %p150
      $region22: #{tpu_custom_call.1} parent=5 // pred_check_branch
        %153 = sbr.rel (%p151) target = $region24
      $region23: #{tpu_custom_call.1} parent=5 // pred_region
        // Predicated region
        $region25: #{tpu_custom_call.1} parent=23 // pred_check
          %p154 = pneg %p55
        $region26: #{tpu_custom_call.1} parent=23 // pred_check_branch
          %156 = sbr.rel (%p154) target = $region28
        $region27: #{tpu_custom_call.1} parent=23 // pred_region
          %s157 = sand.u32 %s45, 1
          %s158 = scalar_lea.sflag [#allocation5], %s157
          %s159 = sand.u32 %s45, 1
          %s160 = smul.addr %s159, 64
          %s161 = scalar_lea.vmem [#allocation4], %s160
          %s162 = sadd.s32 %s20, %s21
          %s163 = smul.u32 2, %s162
          %s165 = ssub.s32 1024, 1024
          %166 = vsyncadd %s158, %s165
          %s167 = smul.addr %s19, 8
          %s168 = sadd.s32 %s163, %s167
          %s169 = smul.addr %s168, 128
          %s170 = scalar_lea.hbm %s0, %s169
          %s171 = sshll.u32 %s161, 4
          %s172 = int_to_ptr.vmem [resolvable:$true] %s171
          %177 = dma.hbm_to_vmem [thread:$0]  %s170, 1024, %s172, %s158, 256, 256, 16
        $region28: #{tpu_custom_call.1} parent=23 // pred_fallthru
          _
      $region24: #{tpu_custom_call.1} parent=5 // pred_fallthru
        _
      %p178 = scmp.le.s32.totalorder 1, %s12
      %p179 = scmp.lt.s32.totalorder %s12, 3
      %p180 = pnand %p178, %p179
      %p181 = pneg %p180
      // Predicated region
      $region29: #{tpu_custom_call.1} parent=5 // pred_check
        _
      $region30: #{tpu_custom_call.1} parent=5 // pred_check_branch
        %183 = sbr.rel (%p180) target = $region32
      $region31: #{tpu_custom_call.1} parent=5 // pred_region
        %s184 = ssub.s32 %s12, 1
        %s185 = sand.u32 %s48, 1
        %s186 = scalar_lea.sflag [#allocation5], %s185
        %s187 = sand.u32 %s48, 1
        %s188 = smul.addr %s187, 64
        %s189 = scalar_lea.vmem [#allocation4], %s188
        // Predicated region
        $region33: #{tpu_custom_call.1} parent=31 // pred_check
          %p190 = pneg %p61
        $region34: #{tpu_custom_call.1} parent=31 // pred_check_branch
          %192 = sbr.rel (%p190) target = $region36
        $region35: #{tpu_custom_call.1} parent=31 // pred_region
          %193 = dma.done %s186, 1024
        $region36: #{tpu_custom_call.1} parent=31 // pred_fallthru
          _
        %s194 = sand.u32 %s48, 1
        %s195 = scalar_lea.sflag [#allocation5], %s194
        %s196 = sand.u32 %s48, 1
        %s197 = smul.addr %s196, 64
        %s198 = scalar_lea.vmem [#allocation4], %s197
        %p199 = pneg %p61
        %p200 = pneg %p58
        %p201 = pneg %p82
        %p202 = pneg %p79
        %p203 = pneg %p103
        %p204 = pneg %p100
        %p205 = pneg %p129
        %p206 = pneg %p126
        %p207 = scmp.lt.s32.totalorder %s22, 1
        %s208 = scalar_select %p207, %s22, 1
        %s209 = smul.addr %s208, 4
        %s210 = smul.addr %s209, 8
        %s211 = scalar_lea.vmem %s3, %s210
        %s212 = sadd.s32 %s23, %s24
        %s213 = smul.u32 2, %s212
        %p214 = scmp.lt.s32.totalorder %s22, 1
        %s215 = scalar_select %p214, %s22, 1
        %s216 = smul.addr %s215, 4
        %s217 = smul.addr %s216, 8
        %s218 = scalar_lea.vmem %s3, %s217
        %p219 = scmp.eq.s32.totalorder %s24, 0
        // Predicated region
        $region37: #{tpu_custom_call.1} parent=31 // pred_check
          %p220 = pneg %p219
        $region38: #{tpu_custom_call.1} parent=31 // pred_check_branch
          %222 = sbr.rel (%p220) target = $region40
        $region39: #{tpu_custom_call.1} parent=31 // pred_region
          %vm223 = vcmask 7168
          %224 = vst.msk [vmem:[#allocation2] sm:$0xff] %vm223, 0.0
          %225 = vst.msk [vmem:[#allocation2 + $0x8] sm:$0xff] %vm223, 0.0
          %226 = vst.msk [vmem:[#allocation2 + $0x10] sm:$0xff] %vm223, 0.0
          %227 = vst.msk [vmem:[#allocation2 + $0x18] sm:$0xff] %vm223, 0.0
          %228 = vst.msk [vmem:[#allocation3] sm:$0xff] %vm223, -inf
          %229 = vst.msk [vmem:[#allocation3 + $0x8] sm:$0xff] %vm223, -inf
          %230 = vst.msk [vmem:[#allocation3 + $0x10] sm:$0xff] %vm223, -inf
          %231 = vst.msk [vmem:[#allocation3 + $0x18] sm:$0xff] %vm223, -inf
        $region40: #{tpu_custom_call.1} parent=31 // pred_fallthru
          _
        %v232 = vld [vmem:[%s189] sm:$0xff]
        %v233 = vld [vmem:[%s189 + $0x8] sm:$0xff]
        %v234 = vld [vmem:[%s189 + $0x10] sm:$0xff]
        %v235 = vld [vmem:[%s189 + $0x18] sm:$0xff]
        %v236 = vld [vmem:[%s189 + $0x20] sm:$0xff]
        %v237 = vld [vmem:[%s189 + $0x28] sm:$0xff]
        %v238 = vld [vmem:[%s189 + $0x30] sm:$0xff]
        %v239 = vld [vmem:[%s189 + $0x38] sm:$0xff]
        %v240 = vld [vmem:[#allocation2] sm:$0xff]
        %v241 = vld [vmem:[#allocation2 + $0x8] sm:$0xff]
        %v242 = vld [vmem:[#allocation2 + $0x10] sm:$0xff]
        %v243 = vld [vmem:[#allocation2 + $0x18] sm:$0xff]
        %v244 = vadd.f32 %v232, %v233
        %245 = vadd.xlane.f32.xlu0 %v244
        %v246 = vpop.xlane.xlu0 %245
        %v247 = vadd.f32 %v234, %v235
        %248 = vadd.xlane.f32.xlu0 %v247
        %v249 = vpop.xlane.xlu0 %248
        %v250 = vadd.f32 %v236, %v237
        %251 = vadd.xlane.f32.xlu0 %v250
        %v252 = vpop.xlane.xlu0 %251
        %v253 = vadd.f32 %v238, %v239
        %254 = vadd.xlane.f32.xlu0 %v253
        %v255 = vpop.xlane.xlu0 %254
        %v256 = vadd.f32 %v240, %v246
        %v257 = vadd.f32 %v241, %v249
        %v258 = vadd.f32 %v242, %v252
        %v259 = vadd.f32 %v243, %v255
        %vm260 = vcmask 7168
        %261 = vst.msk [vmem:[#allocation2] sm:$0xff] %vm260, %v256
        %262 = vst.msk [vmem:[#allocation2 + $0x8] sm:$0xff] %vm260, %v257
        %263 = vst.msk [vmem:[#allocation2 + $0x10] sm:$0xff] %vm260, %v258
        %264 = vst.msk [vmem:[#allocation2 + $0x18] sm:$0xff] %vm260, %v259
        %v265 = vld [vmem:[#allocation3] sm:$0xff]
        %v266 = vld [vmem:[#allocation3 + $0x8] sm:$0xff]
        %v267 = vld [vmem:[#allocation3 + $0x10] sm:$0xff]
        %v268 = vld [vmem:[#allocation3 + $0x18] sm:$0xff]
        %v269 = vmax.f32 %v232, %v233
        %270 = vmax.xlane.f32.xlu0 %v269
        %v271 = vpop.xlane.xlu0 %270
        %v272 = vmax.f32 %v234, %v235
        %273 = vmax.xlane.f32.xlu0 %v272
        %v274 = vpop.xlane.xlu0 %273
        %v275 = vmax.f32 %v236, %v237
        %276 = vmax.xlane.f32.xlu0 %v275
        %v277 = vpop.xlane.xlu0 %276
        %v278 = vmax.f32 %v238, %v239
        %279 = vmax.xlane.f32.xlu0 %v278
        %v280 = vpop.xlane.xlu0 %279
        %v281 = vmax.f32 %v265, %v271
        %v282 = vmax.f32 %v266, %v274
        %v283 = vmax.f32 %v267, %v277
        %v284 = vmax.f32 %v268, %v280
        %285 = vst.msk [vmem:[#allocation3] sm:$0xff] %vm260, %v281
        %286 = vst.msk [vmem:[#allocation3 + $0x8] sm:$0xff] %vm260, %v282
        %287 = vst.msk [vmem:[#allocation3 + $0x10] sm:$0xff] %vm260, %v283
        %288 = vst.msk [vmem:[#allocation3 + $0x18] sm:$0xff] %vm260, %v284
        // Predicated region
        $region41: #{tpu_custom_call.1} parent=31 // pred_check
          %p289 = pneg %p219
        $region42: #{tpu_custom_call.1} parent=31 // pred_check_branch
          %291 = sbr.rel (%p289) target = $region44
        $region43: #{tpu_custom_call.1} parent=31 // pred_region
          %v292 = vld [vmem:[#allocation2] sm:$0xff]
          %v293 = vld [vmem:[#allocation2 + $0x8] sm:$0xff]
          %v294 = vld [vmem:[#allocation2 + $0x10] sm:$0xff]
          %v295 = vld [vmem:[#allocation2 + $0x18] sm:$0xff]
          %v296 = vmul.f32 %v292, 0.00390625
          %v297 = vmul.f32 %v293, 0.00390625
          %v298 = vmul.f32 %v294, 0.00390625
          %v299 = vmul.f32 %v295, 0.00390625
          %v300 = vld [vmem:[#allocation3] sm:$0xff]
          %v301 = vld [vmem:[#allocation3 + $0x8] sm:$0xff]
          %v302 = vld [vmem:[#allocation3 + $0x10] sm:$0xff]
          %v303 = vld [vmem:[#allocation3 + $0x18] sm:$0xff]
          %308 = vrot.lane.b32.xlu0 %v300, 1
          %v309 = vpop.permute.xlu0 %308
          %310 = vrot.lane.b32.xlu0 %v301, 1
          %v311 = vpop.permute.xlu0 %310
          %312 = vrot.lane.b32.xlu0 %v302, 1
          %v313 = vpop.permute.xlu0 %312
          %314 = vrot.lane.b32.xlu0 %v303, 1
          %v315 = vpop.permute.xlu0 %314
          %v320 = vsel %vm260, %v296, %v309
          %v321 = vsel %vm260, %v297, %v311
          %v322 = vsel %vm260, %v298, %v313
          %v323 = vsel %vm260, %v299, %v315
          %v324 = vld [vmem:[%s1] sm:$0x3]
          %v325 = vld [vmem:[%s2] sm:$0xff]
          %v326 = vld [vmem:[%s2 + $0x8] sm:$0xff]
          %v327 = vld [vmem:[%s2 + $0x10] sm:$0xff]
          %v328 = vld [vmem:[%s2 + $0x18] sm:$0xff]
          %vm329 = vcmask 261120
          %v331 = vsel %vm329, %v324, 0
          %333 = vmatprep.subr.mxu0 0.0
          %334 = vmatpush1.msra.mxu0 0.0
          %335 = vmatprep.subr.mxu0 0.0
          %336 = vmatpush1.msra.mxu0 0.0
          %337 = vmatprep.subr.mxu0 0.0
          %338 = vmatpush1.msra.mxu0 0.0
          %339 = vmatprep.subr.mxu0 0.0
          %340 = vmatpush1.msra.mxu0 0.0
          %341 = vmatprep.subr.mxu0 0.0
          %342 = vmatpush1.msra.mxu0 0.0
          %343 = vmatprep.subr.mxu0 0.0
          %344 = vmatpush1.msra.mxu0 0.0
          %345 = vmatprep.subr.mxu0 0.0
          %346 = vmatpush1.msra.mxu0 0.0
          %347 = vmatprep.subr.mxu0 0.0
          %348 = vmatpush1.msra.mxu0 0.0
          %349 = vmatprep.subr.mxu0 0.0
          %350 = vmatpush1.msra.mxu0 0.0
          %351 = vmatprep.subr.mxu0 0.0
          %352 = vmatpush1.msra.mxu0 0.0
          %353 = vmatprep.subr.mxu0 0.0
          %354 = vmatpush1.msra.mxu0 0.0
          %355 = vmatprep.subr.mxu0 0.0
          %356 = vmatpush1.msra.mxu0 0.0
          %357 = vmatprep.subr.mxu0 0.0
          %358 = vmatpush1.msra.mxu0 %v323
          %359 = vmatprep.subr.mxu0 0.0
          %360 = vmatpush1.msra.mxu0 %v322
          %361 = vmatprep.subr.mxu0 0.0
          %362 = vmatpush1.msra.mxu0 %v321
          %363 = vmatprep.subr.mxu0 0.0
          %364 = vmatpush1.msra.mxu0 %v320
          %365 = vmatprep.subr.mxu0 0.0
          %366 = vmatpush2.msra.mxu0 0.0
          %367 = vmatprep.subr.mxu0 0.0
          %368 = vmatpush2.msra.mxu0 0.0
          %369 = vmatprep.subr.mxu0 0.0
          %370 = vmatpush2.msra.mxu0 0.0
          %371 = vmatprep.subr.mxu0 0.0
          %372 = vmatpush2.msra.mxu0 0.0
          %373 = vmatprep.subr.mxu0 0.0
          %374 = vmatpush2.msra.mxu0 0.0
          %375 = vmatprep.subr.mxu0 0.0
          %376 = vmatpush2.msra.mxu0 0.0
          %377 = vmatprep.subr.mxu0 0.0
          %378 = vmatpush2.msra.mxu0 0.0
          %379 = vmatprep.subr.mxu0 0.0
          %380 = vmatpush2.msra.mxu0 0.0
          %381 = vmatprep.subr.mxu0 0.0
          %382 = vmatpush2.msra.mxu0 0.0
          %383 = vmatprep.subr.mxu0 0.0
          %384 = vmatpush2.msra.mxu0 0.0
          %385 = vmatprep.subr.mxu0 0.0
          %386 = vmatpush2.msra.mxu0 0.0
          %387 = vmatprep.subr.mxu0 0.0
          %388 = vmatpush2.msra.mxu0 0.0
          %389 = vmatprep.subr.mxu0 0.0
          %390 = vmatpush2.msra.mxu0 0.0
          %391 = vmatprep.subr.mxu0 0.0
          %392 = vmatpush2.msra.mxu0 0.0
          %393 = vmatprep.subr.mxu0 0.0
          %394 = vmatpush2.msra.mxu0 0.0
          %395 = vmatprep.subr.mxu0 0.0
          %396 = vmatpush2.msra.mxu0 0.0
          %397 = vmatprep.mubr.f32.mxu0 0.0
          %398 = vmatmul.mubr.f32.gmra.mxu0 %v331
          %v399 = vpop.f32.mrf.mxu0
          %v400 = vadd.f32 0.0, %v399
          %v401 = vpop.f32.mrf.mxu0
          %402 = vdwg.mxu0
          %v403 = vmax.f32 %v400, 0.0
          %vm404 = vcmask 15360
          %v406 = vsel %vm404, %v325, 0
          %v409 = vsel %vm404, %v326, 0
          %v412 = vsel %vm404, %v327, 0
          %v415 = vsel %vm404, %v328, 0
          %vm417 = vcmask 1041408
          %v419 = vsel %vm417, %v403, 0
          %421 = vmatprep.subr.mxu0 0.0
          %422 = vmatpush1.msra.mxu0 0.0
          %423 = vmatprep.subr.mxu0 0.0
          %424 = vmatpush1.msra.mxu0 0.0
          %425 = vmatprep.subr.mxu0 0.0
          %426 = vmatpush1.msra.mxu0 0.0
          %427 = vmatprep.subr.mxu0 0.0
          %428 = vmatpush1.msra.mxu0 0.0
          %429 = vmatprep.subr.mxu0 0.0
          %430 = vmatpush1.msra.mxu0 0.0
          %431 = vmatprep.subr.mxu0 0.0
          %432 = vmatpush1.msra.mxu0 0.0
          %433 = vmatprep.subr.mxu0 0.0
          %434 = vmatpush1.msra.mxu0 0.0
          %435 = vmatprep.subr.mxu0 0.0
          %436 = vmatpush1.msra.mxu0 0.0
          %437 = vmatprep.subr.mxu0 0.0
          %438 = vmatpush1.msra.mxu0 0.0
          %439 = vmatprep.subr.mxu0 0.0
          %440 = vmatpush1.msra.mxu0 0.0
          %441 = vmatprep.subr.mxu0 0.0
          %442 = vmatpush1.msra.mxu0 0.0
          %443 = vmatprep.subr.mxu0 0.0
          %444 = vmatpush1.msra.mxu0 0.0
          %445 = vmatprep.subr.mxu0 0.0
          %446 = vmatpush1.msra.mxu0 0.0
          %447 = vmatprep.subr.mxu0 0.0
          %448 = vmatpush1.msra.mxu0 0.0
          %449 = vmatprep.subr.mxu0 0.0
          %450 = vmatpush1.msra.mxu0 0.0
          %451 = vmatprep.subr.mxu0 0.0
          %452 = vmatpush1.msra.mxu0 %v419
          %453 = vmatprep.subr.mxu0 0.0
          %454 = vmatpush2.msra.mxu0 0.0
          %455 = vmatprep.subr.mxu0 0.0
          %456 = vmatpush2.msra.mxu0 0.0
          %457 = vmatprep.subr.mxu0 0.0
          %458 = vmatpush2.msra.mxu0 0.0
          %459 = vmatprep.subr.mxu0 0.0
          %460 = vmatpush2.msra.mxu0 0.0
          %461 = vmatprep.subr.mxu0 0.0
          %462 = vmatpush2.msra.mxu0 0.0
          %463 = vmatprep.subr.mxu0 0.0
          %464 = vmatpush2.msra.mxu0 0.0
          %465 = vmatprep.subr.mxu0 0.0
          %466 = vmatpush2.msra.mxu0 0.0
          %467 = vmatprep.subr.mxu0 0.0
          %468 = vmatpush2.msra.mxu0 0.0
          %469 = vmatprep.subr.mxu0 0.0
          %470 = vmatpush2.msra.mxu0 0.0
          %471 = vmatprep.subr.mxu0 0.0
          %472 = vmatpush2.msra.mxu0 0.0
          %473 = vmatprep.subr.mxu0 0.0
          %474 = vmatpush2.msra.mxu0 0.0
          %475 = vmatprep.subr.mxu0 0.0
          %476 = vmatpush2.msra.mxu0 0.0
          %477 = vmatprep.subr.mxu0 0.0
          %478 = vmatpush2.msra.mxu0 0.0
          %479 = vmatprep.subr.mxu0 0.0
          %480 = vmatpush2.msra.mxu0 0.0
          %481 = vmatprep.subr.mxu0 0.0
          %482 = vmatpush2.msra.mxu0 0.0
          %483 = vmatprep.subr.mxu0 0.0
          %484 = vmatpush2.msra.mxu0 0.0
          %485 = vmatprep.mubr.f32.mxu0 0.0
          %486 = vmatmul.mubr.f32.gmra.mxu0 %v406
          %v487 = vpop.f32.mrf.mxu0
          %v488 = vadd.f32 0.0, %v487
          %v489 = vpop.f32.mrf.mxu0
          %490 = vmatprep.mubr.f32.mxu0 0.0
          %491 = vmatmul.mubr.f32.gmra.mxu0 %v409
          %v492 = vpop.f32.mrf.mxu0
          %v493 = vadd.f32 0.0, %v492
          %v494 = vpop.f32.mrf.mxu0
          %495 = vmatprep.mubr.f32.mxu0 0.0
          %496 = vmatmul.mubr.f32.gmra.mxu0 %v412
          %v497 = vpop.f32.mrf.mxu0
          %v498 = vadd.f32 0.0, %v497
          %v499 = vpop.f32.mrf.mxu0
          %500 = vmatprep.mubr.f32.mxu0 0.0
          %501 = vmatmul.mubr.f32.gmra.mxu0 %v415
          %v502 = vpop.f32.mrf.mxu0
          %v503 = vadd.f32 0.0, %v502
          %v504 = vpop.f32.mrf.mxu0
          %505 = vdwg.mxu0
          %510 = vrot.lane.b32.xlu0 %v488, 127
          %v511 = vpop.permute.xlu0 %510
          %512 = vrot.lane.b32.xlu0 %v493, 127
          %v513 = vpop.permute.xlu0 %512
          %514 = vrot.lane.b32.xlu0 %v498, 127
          %v515 = vpop.permute.xlu0 %514
          %516 = vrot.lane.b32.xlu0 %v503, 127
          %v517 = vpop.permute.xlu0 %516
          %v522 = vadd.f32 %v488, %v511
          %v523 = vadd.f32 %v493, %v513
          %v524 = vadd.f32 %v498, %v515
          %v525 = vadd.f32 %v503, %v517
          %v526 = vxor.u32 %v522, 2147483648
          %v527 = vxor.u32 %v523, 2147483648
          %v528 = vxor.u32 %v524, 2147483648
          %v529 = vxor.u32 %v525, 2147483648
          %v530 = vmul.f32 %v526, 1.442695
          %v531 = vpow.pop %v530
          %v532 = vmul.f32 %v527, 1.442695
          %v533 = vpow.pop %v532
          %v534 = vmul.f32 %v528, 1.442695
          %v535 = vpow.pop %v534
          %v536 = vmul.f32 %v529, 1.442695
          %v537 = vpow.pop %v536
          %v538 = vadd.f32 %v531, 1.0
          %v539 = vadd.f32 %v533, 1.0
          %v540 = vadd.f32 %v535, 1.0
          %v541 = vadd.f32 %v537, 1.0
          %v542 = vrcp.pop %v538
          %v543 = vmul.f32 1.0, %v542
          %v544 = vrcp.pop %v539
          %v545 = vmul.f32 1.0, %v544
          %v546 = vrcp.pop %v540
          %v547 = vmul.f32 1.0, %v546
          %v548 = vrcp.pop %v541
          %v549 = vmul.f32 1.0, %v548
          %550 = vst.msk [vmem:[%s218] sm:$0xff] %vm260, %v543
          %551 = vst.msk [vmem:[%s218 + $0x8] sm:$0xff] %vm260, %v545
          %552 = vst.msk [vmem:[%s218 + $0x10] sm:$0xff] %vm260, %v547
          %553 = vst.msk [vmem:[%s218 + $0x18] sm:$0xff] %vm260, %v549
        $region44: #{tpu_custom_call.1} parent=31 // pred_fallthru
          _
        %p554 = scmp.lt.s32.totalorder %s22, 1
        %s555 = scalar_select %p554, %s22, 1
        %s556 = smul.addr %s555, 4
        %s557 = smul.addr %s556, 8
        %s558 = scalar_lea.vmem %s3, %s557
        // Predicated region
        $region45: #{tpu_custom_call.1} parent=31 // pred_check
          %p559 = pneg %p126
        $region46: #{tpu_custom_call.1} parent=31 // pred_check_branch
          %561 = sbr.rel (%p559) target = $region48
        $region47: #{tpu_custom_call.1} parent=31 // pred_region
          _
        $region48: #{tpu_custom_call.1} parent=31 // pred_fallthru
          _
      $region32: #{tpu_custom_call.1} parent=5 // pred_fallthru
        _
      %p562 = scmp.le.s32.totalorder 2, %s12
      // Predicated region
      $region49: #{tpu_custom_call.1} parent=5 // pred_check
        %p563 = pneg %p562
      $region50: #{tpu_custom_call.1} parent=5 // pred_check_branch
        %565 = sbr.rel (%p563) target = $region52
      $region51: #{tpu_custom_call.1} parent=5 // pred_region
        %s566 = ssub.s32 %s12, 2
        // Predicated region
        $region53: #{tpu_custom_call.1} parent=51 // pred_check
          %p567 = pneg %p132
        $region54: #{tpu_custom_call.1} parent=51 // pred_check_branch
          %569 = sbr.rel (%p567) target = $region56
        $region55: #{tpu_custom_call.1} parent=51 // pred_region
          %p570 = scmp.lt.s32.totalorder %s25, 1
          %s571 = scalar_select %p570, %s25, 1
          %s572 = smul.addr %s571, 4
          %s573 = smul.addr %s572, 8
          %s574 = scalar_lea.vmem %s3, %s573
        $region56: #{tpu_custom_call.1} parent=51 // pred_fallthru
          _
      $region52: #{tpu_custom_call.1} parent=5 // pred_fallthru
        _
    $region6: #{tpu_custom_call.1} parent=1 // loop_footer
      %s16 = sadd.s32 1, %s12
    $region7: #{tpu_custom_call.1} parent=1 // loop_footer_branch
      %11 = sbr.rel target = $region3
    $region8: #{tpu_custom_call.1} parent=1 // loop_exit
      _
    %575 = vsyncpa [#allocation5], 1
    %s576 = scalar_lea.sflag [#allocation5], 1
    %577 = vsyncpa %s576, 1

</llo_original>
